<compile_context>
chip_gen: v7x
topology: tpu7x:2x2x1
jax: 0.10.0
libtpu: 0.0.40
codegen_flags: <defaults>
</compile_context>

<pallas_src>
import functools

import jax
import jax.numpy as jnp
from jax.experimental import pallas as pl
from jax.experimental.pallas import tpu as pltpu

LANE = 128
SUBLANE = 8
MAX_TILE_ROWS = 4096  # (4096, 128) f32 = 2 MiB per input pipeline buffer.


def _dice_loss_kernel(yt_ref, yp_ref, out_ref, acc_ref, *,
                      smoothing, tile_rows, valid_rows):
    i = pl.program_id(0)

    @pl.when(i == 0)
    def _init():
        acc_ref[...] = jnp.zeros_like(acc_ref)

    yt = yt_ref[...].astype(jnp.float32)
    yp = yp_ref[...].astype(jnp.float32)

    # Mask rows of the (possibly) ragged last block.  Statically skipped when
    # the row count divides the tile evenly (no per-step cost in that case);
    # otherwise it is cheap VPU filler under the HBM-bound roofline.
    if valid_rows % tile_rows != 0:
        row = i * tile_rows + jax.lax.broadcasted_iota(
            jnp.int32, (tile_rows, LANE), 0)
        in_bounds = row < valid_rows
        yt = jnp.where(in_bounds, yt, 0.0)
        yp = jnp.where(in_bounds, yp, 0.0)

    # vreg-shaped partial sums: collapse the tile down to one (8, 128) slab per
    # quantity using plain VPU adds (no cross-lane work in the hot loop).  The
    # (tile_rows, 128) -> (tile_rows/8, 8, 128) reshape preserves the native
    # (8, 128) tiling, so it is layout-free.
    prod = (yt * yp).reshape(tile_rows // SUBLANE, SUBLANE, LANE)
    both = (yt + yp).reshape(tile_rows // SUBLANE, SUBLANE, LANE)
    acc_ref[0] += jnp.sum(prod, axis=0)   # partials of intersection
    acc_ref[1] += jnp.sum(both, axis=0)   # partials of sum(y_true)+sum(y_pred)

    @pl.when(i == pl.num_programs(0) - 1)
    def _finalize():
        inter = jnp.sum(acc_ref[0])
        denom = jnp.sum(acc_ref[1])
        dice = (2.0 * inter + smoothing) / (denom + smoothing)
        out_ref[0, 0] = 1.0 - dice


def dice_loss(y_true, y_pred, smoothing_factor=0.01, max_tile_rows=MAX_TILE_ROWS):
    """Pallas TPU implementation of DiceLoss.forward(y_true, y_pred)."""
    assert y_true.shape == y_pred.shape
    assert max_tile_rows % SUBLANE == 0

    # Flatten; keep native dtype (cast to f32 per-tile inside the kernel).
    yt = jnp.ravel(y_true)
    yp = jnp.ravel(y_pred)
    n = yt.shape[0]

    # Only pad to (8*128)-element alignment; the padded zeros do not perturb
    # any of the sums and this copy only happens for non-aligned sizes.  The
    # ragged last *grid block* is masked in-kernel, so there is never a pad up
    # to the full tile multiple.
    chunk = SUBLANE * LANE
    pad = (-n) % chunk
    if pad:
        yt = jnp.pad(yt, (0, pad))
        yp = jnp.pad(yp, (0, pad))
    rows = yt.shape[0] // LANE
    yt2 = yt.reshape(rows, LANE)
    yp2 = yp.reshape(rows, LANE)

    tile_rows = min(max_tile_rows, rows)   # rows is a multiple of 8
    grid = (pl.cdiv(rows, tile_rows),)

    kernel = functools.partial(
        _dice_loss_kernel,
        smoothing=float(smoothing_factor),
        tile_rows=tile_rows,
        valid_rows=rows,
    )

    out = pl.pallas_call(
        kernel,
        out_shape=jax.ShapeDtypeStruct((1, 1), jnp.float32),
        grid_spec=pltpu.PrefetchScalarGridSpec(
            num_scalar_prefetch=0,
            grid=grid,
            in_specs=[
                pl.BlockSpec((tile_rows, LANE), lambda i: (i, 0)),
                pl.BlockSpec((tile_rows, LANE), lambda i: (i, 0)),
            ],
            out_specs=pl.BlockSpec(memory_space=pltpu.SMEM),
            scratch_shapes=[pltpu.VMEM((2, SUBLANE, LANE), jnp.float32)],
        ),
        compiler_params=pltpu.CompilerParams(
            # Sequential accumulation over the single reduction axis.
            # TODO(synk): on v7x, very large inputs could shard this axis over
            # the two TensorCores with a tiny combine epilogue.
            dimension_semantics=("arbitrary",),
        ),
    )(yt2, yp2)

    return out[0, 0]


def dice_loss_ref(y_true, y_pred, smoothing_factor=0.01):
    yt = jnp.ravel(y_true).astype(jnp.float32)
    yp = jnp.ravel(y_pred).astype(jnp.float32)
    inter = jnp.sum(yt * yp)
    dice = (2.0 * inter + smoothing_factor) / (
        jnp.sum(yt) + jnp.sum(yp) + smoothing_factor)
    return 1.0 - dice


if __name__ == "__main__":
    key = jax.random.PRNGKey(0)
    k1, k2, k3, k4 = jax.random.split(key, 4)

    # NCHW-shaped inputs, as the PyTorch module would receive.
    shape = (2, 4, 16, 16)
    y_true = (jax.random.uniform(k1, shape) > 0.5).astype(jnp.float32)
    y_pred = jax.random.uniform(k2, shape, dtype=jnp.float32)

    loss = jax.block_until_ready(dice_loss(y_true, y_pred))
    ref = jax.block_until_ready(dice_loss_ref(y_true, y_pred))
    assert jnp.allclose(loss, ref, rtol=1e-5, atol=1e-5), (loss, ref)

    # Exercise the multi-step grid accumulation path with a small tile.
    loss_multi = jax.block_until_ready(dice_loss(y_true, y_pred, max_tile_rows=8))
    assert jnp.allclose(loss_multi, ref, rtol=1e-5, atol=1e-5), (loss_multi, ref)

    # Exercise the ragged-last-block (in-kernel mask) path:
    # (3,3,16,16) = 2304 elems -> pad to 3072 -> 24 rows; tile_rows=16 -> grid
    # of 2 with a half-valid last block.
    shape2 = (3, 3, 16, 16)
    y_true2 = (jax.random.uniform(k3, shape2) > 0.5).astype(jnp.float32)
    y_pred2 = jax.random.uniform(k4, shape2, dtype=jnp.float32)
    loss_ragged = jax.block_until_ready(
        dice_loss(y_true2, y_pred2, max_tile_rows=16))
    ref2 = jax.block_until_ready(dice_loss_ref(y_true2, y_pred2))
    assert jnp.allclose(loss_ragged, ref2, rtol=1e-5, atol=1e-5), (loss_ragged, ref2)

    print("KERNEL_OK")
</pallas_src>

<mosaic_0001>
module attributes {stable_mosaic.version = 11 : i64} {
  func.func @_dice_loss_kernel(%arg0: i32, %arg1: memref<16x128xf32, #tpu.memory_space<vmem>>, %arg2: memref<16x128xf32, #tpu.memory_space<vmem>>, %arg3: memref<1x1xf32, #tpu.memory_space<smem>>, %arg4: memref<2x8x128xf32, #tpu.memory_space<vmem>>) attributes {dimension_semantics = [#tpu.dimension_semantics<arbitrary>], iteration_bounds = array<i64: 1>, scalar_prefetch = 0 : i64, scratch_operands = 1 : i64, tpu.core_type = #tpu.core_type<tc>, window_params = [{transform_indices = @transform_0, window_bounds = array<i64: 16, 128>}, {transform_indices = @transform_1, window_bounds = array<i64: 16, 128>}, {transform_indices = @transform_2, window_bounds = array<i64: 1, 1>}]} {
    %c0_i32 = arith.constant 0 : i32
    %0 = arith.cmpi eq, %arg0, %c0_i32 : i32
    %1 = arith.extui %0 : i1 to i32
    %c0_i32_0 = arith.constant 0 : i32
    %2 = arith.cmpi ne, %1, %c0_i32_0 : i32
    scf.if %2 {
      %cst_18 = arith.constant 0.000000e+00 : f32
      %26 = vector.broadcast %cst_18 : f32 to vector<2x8x128xf32>
      %c0_19 = arith.constant 0 : index
      %c0_20 = arith.constant 0 : index
      %c0_21 = arith.constant 0 : index
      %27 = vector.load %arg4[%c0_19, %c0_20, %c0_21] : memref<2x8x128xf32, #tpu.memory_space<vmem>>, vector<2x8x128xf32>
      tpu.vector_store %arg4[%c0_19, %c0_20, %c0_21], %26 {strides = array<i32>} : memref<2x8x128xf32, #tpu.memory_space<vmem>>, vector<2x8x128xf32>,
    } else {
    }
    %c0 = arith.constant 0 : index
    %c0_1 = arith.constant 0 : index
    %3 = vector.load %arg1[%c0, %c0_1] : memref<16x128xf32, #tpu.memory_space<vmem>>, vector<16x128xf32>
    %c0_2 = arith.constant 0 : index
    %c0_3 = arith.constant 0 : index
    %4 = vector.load %arg2[%c0_2, %c0_3] : memref<16x128xf32, #tpu.memory_space<vmem>>, vector<16x128xf32>
    %5 = arith.mulf %3, %4 : vector<16x128xf32>
    %6 = vector.shape_cast %5 : vector<16x128xf32> to vector<2x8x128xf32>
    %7 = arith.addf %3, %4 : vector<16x128xf32>
    %8 = vector.shape_cast %7 : vector<16x128xf32> to vector<2x8x128xf32>
    %c0_4 = arith.constant 0 : index
    %c0_5 = arith.constant 0 : index
    %c0_6 = arith.constant 0 : index
    %9 = vector.load %arg4[%c0_4, %c0_5, %c0_6] : memref<2x8x128xf32, #tpu.memory_space<vmem>>, vector<1x8x128xf32>
    %10 = vector.shape_cast %9 : vector<1x8x128xf32> to vector<8x128xf32>
    %cst = arith.constant dense<0.000000e+00> : vector<8x128xf32>
    %11 = vector.multi_reduction <add>, %6, %cst [0] : vector<2x8x128xf32> to vector<8x128xf32>
    %12 = arith.addf %10, %11 : vector<8x128xf32>
    %c0_7 = arith.constant 0 : index
    %c0_8 = arith.constant 0 : index
    %c0_9 = arith.constant 0 : index
    %13 = vector.load %arg4[%c0_7, %c0_8, %c0_9] : memref<2x8x128xf32, #tpu.memory_space<vmem>>, vector<1x8x128xf32>
    %14 = vector.shape_cast %13 : vector<1x8x128xf32> to vector<8x128xf32>
    %15 = vector.shape_cast %12 : vector<8x128xf32> to vector<1x8x128xf32>
    tpu.vector_store %arg4[%c0_7, %c0_8, %c0_9], %15 {strides = array<i32>} : memref<2x8x128xf32, #tpu.memory_space<vmem>>, vector<1x8x128xf32>,
    %c1 = arith.constant 1 : index
    %c0_10 = arith.constant 0 : index
    %c0_11 = arith.constant 0 : index
    %16 = vector.load %arg4[%c1, %c0_10, %c0_11] : memref<2x8x128xf32, #tpu.memory_space<vmem>>, vector<1x8x128xf32>
    %17 = vector.shape_cast %16 : vector<1x8x128xf32> to vector<8x128xf32>
    %cst_12 = arith.constant dense<0.000000e+00> : vector<8x128xf32>
    %18 = vector.multi_reduction <add>, %8, %cst_12 [0] : vector<2x8x128xf32> to vector<8x128xf32>
    %19 = arith.addf %17, %18 : vector<8x128xf32>
    %c1_13 = arith.constant 1 : index
    %c0_14 = arith.constant 0 : index
    %c0_15 = arith.constant 0 : index
    %20 = vector.load %arg4[%c1_13, %c0_14, %c0_15] : memref<2x8x128xf32, #tpu.memory_space<vmem>>, vector<1x8x128xf32>
    %21 = vector.shape_cast %20 : vector<1x8x128xf32> to vector<8x128xf32>
    %22 = vector.shape_cast %19 : vector<8x128xf32> to vector<1x8x128xf32>
    tpu.vector_store %arg4[%c1_13, %c0_14, %c0_15], %22 {strides = array<i32>} : memref<2x8x128xf32, #tpu.memory_space<vmem>>, vector<1x8x128xf32>,
    %c0_i32_16 = arith.constant 0 : i32
    %23 = arith.cmpi eq, %arg0, %c0_i32_16 : i32
    %24 = arith.extui %23 : i1 to i32
    %c0_i32_17 = arith.constant 0 : i32
    %25 = arith.cmpi ne, %24, %c0_i32_17 : i32
    scf.if %25 {
      %c0_18 = arith.constant 0 : index
      %c0_19 = arith.constant 0 : index
      %c0_20 = arith.constant 0 : index
      %26 = vector.load %arg4[%c0_18, %c0_19, %c0_20] : memref<2x8x128xf32, #tpu.memory_space<vmem>>, vector<1x8x128xf32>
      %27 = vector.shape_cast %26 : vector<1x8x128xf32> to vector<8x128xf32>
      %28 = vector.shape_cast %27 : vector<8x128xf32> to vector<1x8x128xf32>
      %cst_21 = arith.constant dense<0.000000e+00> : vector<1xf32>
      %29 = vector.multi_reduction <add>, %28, %cst_21 [1, 2] : vector<1x8x128xf32> to vector<1xf32>
      %30 = vector.shape_cast %29 : vector<1xf32> to vector<1x1x1xf32>
      %31 = vector.extract %30[0, 0, 0] : f32 from vector<1x1x1xf32>
      %c1_22 = arith.constant 1 : index
      %c0_23 = arith.constant 0 : index
      %c0_24 = arith.constant 0 : index
      %32 = vector.load %arg4[%c1_22, %c0_23, %c0_24] : memref<2x8x128xf32, #tpu.memory_space<vmem>>, vector<1x8x128xf32>
      %33 = vector.shape_cast %32 : vector<1x8x128xf32> to vector<8x128xf32>
      %34 = vector.shape_cast %33 : vector<8x128xf32> to vector<1x8x128xf32>
      %cst_25 = arith.constant dense<0.000000e+00> : vector<1xf32>
      %35 = vector.multi_reduction <add>, %34, %cst_25 [1, 2] : vector<1x8x128xf32> to vector<1xf32>
      %36 = vector.shape_cast %35 : vector<1xf32> to vector<1x1x1xf32>
      %37 = vector.extract %36[0, 0, 0] : f32 from vector<1x1x1xf32>
      %cst_26 = arith.constant 2.000000e+00 : f32
      %38 = arith.mulf %cst_26, %31 : f32
      %cst_27 = arith.constant 0.00999999977 : f32
      %39 = arith.addf %38, %cst_27 : f32
      %cst_28 = arith.constant 0.00999999977 : f32
      %40 = arith.addf %37, %cst_28 : f32
      %41 = arith.divf %39, %40 : f32
      %cst_29 = arith.constant 1.000000e+00 : f32
      %42 = arith.subf %cst_29, %41 : f32
      %c0_30 = arith.constant 0 : index
      %c0_31 = arith.constant 0 : index
      %43 = memref.load %arg3[%c0_30, %c0_31] : memref<1x1xf32, #tpu.memory_space<smem>>
      memref.store %42, %arg3[%c0_30, %c0_31] : memref<1x1xf32, #tpu.memory_space<smem>>
    } else {
    }
    return
  }
  func.func @transform_0(%arg0: i32) -> (i32, i32) {
    %c0_i32 = arith.constant 0 : i32
    %c0_i32_0 = arith.constant 0 : i32
    return %arg0, %c0_i32 : i32, i32
  }
  func.func @transform_1(%arg0: i32) -> (i32, i32) {
    %c0_i32 = arith.constant 0 : i32
    %c0_i32_0 = arith.constant 0 : i32
    return %arg0, %c0_i32 : i32, i32
  }
  func.func @transform_2(%arg0: i32) -> (i32, i32) {
    %c0_i32 = arith.constant 0 : i32
    %c0_i32_0 = arith.constant 0 : i32
    %c0_i32_1 = arith.constant 0 : i32
    return %c0_i32, %c0_i32_0 : i32, i32
  }
}

</mosaic_0001>

<llo_original>
// kernel: tpu_custom_call.1
$region0: #{tpu_custom_call.1}
  #allocation0 [shape = 'u32[]', space=smem, size = 0x4, offset = 0x4, fixed_abs, tag = 'smem constant byte address 0x4 - core index']
  #allocation1 [shape = 'u32[144,128]{1,0:T(1,128)}', space=vmem, size = 0x12000, scoped, tag = 'internal scratch']
  #allocation2 [shape = 'f32[2,8,128]{2,1,0:T(8,128)}', space=vmem, size = 0x2000, scoped, tag = 'scratch operand']
  %s0 = inlined_call_operand.hbm [shape: f32[16,128], index: 0, kind: input, shape index: {}]
  %s1 = inlined_call_operand.hbm [shape: f32[16,128], index: 1, kind: input, shape index: {}]
  %s2 = inlined_call_operand.hbm [shape: f32[1,1], index: 2, kind: output, shape index: {}]
  %s3 = sld [smem:[#allocation0]]
  $region34: #{tpu_custom_call.1} parent=0
    _
  %s5 = ssub.s32 1, %s3
  %s6 = scalar_select 0, %s5, %s3
  $region1: #{tpu_custom_call.1} parent=0
    #allocation3 [shape = 'u8[8192]{0}', space=vmem, size = 0x2000, scoped, tag = 'input window, operand 0, single buffered']
    #allocation4 [shape = 's32[1]{0}', space=sflag, size = 0x4, scoped, tag = 'scoped memory for tpu_custom_call.1']
    #allocation5 [shape = 's32[1]{0}', space=sflag, size = 0x4, scoped, tag = 'scoped memory for tpu_custom_call.1']
    #allocation6 [shape = 'u8[8192]{0}', space=vmem, size = 0x2000, scoped, tag = 'input window, operand 1, single buffered']
    #allocation7 [shape = 's32[1]{0}', space=sflag, size = 0x4, scoped, tag = 'scoped memory for tpu_custom_call.1']
    #allocation8 [shape = 'u8[512]{0}', space=smem, size = 0x200, scoped, tag = 'output window, operand 0, single buffered']
    %7 = vsyncpa [#allocation4], 0
    %8 = vsyncpa [#allocation7], 0
    %9 = vsyncpa [#allocation5], 0
    // Predicated region
    $region2: #{tpu_custom_call.1} parent=1 // pred_check
      _
    $region3: #{tpu_custom_call.1} parent=1 // pred_check_branch
      %11 = sbr.rel (0) target = $region5
    $region4: #{tpu_custom_call.1} parent=1 // pred_region
      %s13 = ssub.s32 256, 256
      %14 = vsyncadd [#allocation4], %s13
      %s15 = sshll.u32 [#allocation3], 4
      %s16 = int_to_ptr.vmem [resolvable:$true] %s15
      %21 = dma.hbm_to_vmem [thread:$0]  %s0, 256, %s16, [#allocation4], 128, 128, 8
    $region5: #{tpu_custom_call.1} parent=1 // pred_fallthru
      _
    // Predicated region
    $region6: #{tpu_custom_call.1} parent=1 // pred_check
      _
    $region7: #{tpu_custom_call.1} parent=1 // pred_check_branch
      %23 = sbr.rel (0) target = $region9
    $region8: #{tpu_custom_call.1} parent=1 // pred_region
      %s25 = ssub.s32 256, 256
      %26 = vsyncadd [#allocation7], %s25
      %s27 = sshll.u32 [#allocation6], 4
      %s28 = int_to_ptr.vmem [resolvable:$true] %s27
      %33 = dma.hbm_to_vmem [thread:$0]  %s1, 256, %s28, [#allocation7], 128, 128, 8
    $region9: #{tpu_custom_call.1} parent=1 // pred_fallthru
      _
    // Predicated region
    $region10: #{tpu_custom_call.1} parent=1 // pred_check
      _
    $region11: #{tpu_custom_call.1} parent=1 // pred_check_branch
      %35 = sbr.rel (0) target = $region13
    $region12: #{tpu_custom_call.1} parent=1 // pred_region
      %36 = dma.done [#allocation4], 256
    $region13: #{tpu_custom_call.1} parent=1 // pred_fallthru
      _
    // Predicated region
    $region14: #{tpu_custom_call.1} parent=1 // pred_check
      _
    $region15: #{tpu_custom_call.1} parent=1 // pred_check_branch
      %38 = sbr.rel (0) target = $region17
    $region16: #{tpu_custom_call.1} parent=1 // pred_region
      %39 = dma.done [#allocation7], 256
    $region17: #{tpu_custom_call.1} parent=1 // pred_fallthru
      _
    %p40 = scmp.eq.s32.totalorder 0, 0
    // Predicated region
    $region18: #{tpu_custom_call.1} parent=1 // pred_check
      %p41 = pneg %p40
    $region19: #{tpu_custom_call.1} parent=1 // pred_check_branch
      %43 = sbr.rel (%p41) target = $region21
    $region20: #{tpu_custom_call.1} parent=1 // pred_region
      %44 = vst [vmem:[#allocation2] sm:$0xff] 0.0
      %45 = vst [vmem:[#allocation2 + $0x8] sm:$0xff] 0.0
    $region21: #{tpu_custom_call.1} parent=1 // pred_fallthru
      _
    %v46 = vld [vmem:[#allocation3] sm:$0xff]
    %v47 = vld [vmem:[#allocation3 + $0x8] sm:$0xff]
    %v48 = vld [vmem:[#allocation6] sm:$0xff]
    %v49 = vld [vmem:[#allocation6 + $0x8] sm:$0xff]
    %v50 = vmul.f32 %v46, %v48
    %v51 = vmul.f32 %v47, %v49
    %v52 = vadd.f32 %v46, %v48
    %v53 = vadd.f32 %v47, %v49
    %v54 = vld [vmem:[#allocation2] sm:$0xff]
    %v55 = vadd.f32 %v50, %v51
    %v56 = vadd.f32 %v54, %v55
    %57 = vst [vmem:[#allocation2] sm:$0xff] %v56
    %s58 = scalar_lea.vmem [#allocation2], 8
    %v59 = vld [vmem:[%s58] sm:$0xff]
    %v60 = vadd.f32 %v52, %v53
    %v61 = vadd.f32 %v59, %v60
    %62 = vst [vmem:[%s58] sm:$0xff] %v61
    // Predicated region
    $region22: #{tpu_custom_call.1} parent=1 // pred_check
      %p63 = pneg %p40
    $region23: #{tpu_custom_call.1} parent=1 // pred_check_branch
      %65 = sbr.rel (%p63) target = $region25
    $region24: #{tpu_custom_call.1} parent=1 // pred_region
      %v66 = vld [vmem:[#allocation2] sm:$0xff]
      %67 = vadd.xlane.f32.xlu0 %v66
      %v68 = vpop.xlane.xlu0 %67
      %v69 = vrot.slane %v68, 4
      %v70 = vadd.f32 %v68, %v69
      %v71 = vrot.slane %v70, 2
      %v72 = vadd.f32 %v70, %v71
      %v73 = vrot.slane %v72, 1
      %v74 = vadd.f32 %v72, %v73
      %s75 = vtos %v74
      %v76 = vld [vmem:[%s58] sm:$0xff]
      %77 = vadd.xlane.f32.xlu0 %v76
      %v78 = vpop.xlane.xlu0 %77
      %v79 = vrot.slane %v78, 4
      %v80 = vadd.f32 %v78, %v79
      %v81 = vrot.slane %v80, 2
      %v82 = vadd.f32 %v80, %v81
      %v83 = vrot.slane %v82, 1
      %v84 = vadd.f32 %v82, %v83
      %s85 = vtos %v84
      %s86 = smul.f32 %s75, 2.0
      %s87 = sadd.f32 %s86, 0.01
      %s88 = sadd.f32 %s85, 0.01
      %v89 = vstv %s88
      %v90 = vrcp.pop %v89
      %s91 = vtos %v90
      %s92 = smul.f32 %s87, %s91
      %s93 = ssub.f32 1.0, %s92
      %s94 = scalar_lea.smem [#allocation8], 0
      %95 = sst [smem:[%s94]] %s93
    $region25: #{tpu_custom_call.1} parent=1 // pred_fallthru
      _
    // Predicated region
    $region26: #{tpu_custom_call.1} parent=1 // pred_check
      _
    $region27: #{tpu_custom_call.1} parent=1 // pred_check_branch
      %97 = sbr.rel (0) target = $region29
    $region28: #{tpu_custom_call.1} parent=1 // pred_region
      %s99 = ssub.s32 16, 16
      %100 = vsyncadd [#allocation5], %s99
      %103 = dma.smem_to_hbm [#allocation8], 16, %s2, [#allocation5]
    $region29: #{tpu_custom_call.1} parent=1 // pred_fallthru
      _
    // Predicated region
    $region30: #{tpu_custom_call.1} parent=1 // pred_check
      _
    $region31: #{tpu_custom_call.1} parent=1 // pred_check_branch
      %105 = sbr.rel (0) target = $region33
    $region32: #{tpu_custom_call.1} parent=1 // pred_region
      %106 = dma.done [#allocation5], 16
    $region33: #{tpu_custom_call.1} parent=1 // pred_fallthru
      _
    %107 = sfence
    %108 = vsyncpa [#allocation4], 1
    %109 = vsyncpa [#allocation7], 1
    %110 = vsyncpa [#allocation5], 1

</llo_original>
